<compile_context>
chip_gen: v6e
topology: v6e:2x2x1
jax: 0.10.0
libtpu: 0.0.40
codegen_flags: <defaults>
</compile_context>

<pallas_src>
import functools

import jax
import jax.numpy as jnp
import numpy as np
from jax.experimental import pallas as pl
from jax.experimental.pallas import tpu as pltpu


def _supcon_kernel(lab_col_ref, cnt_col_ref, lab_row_ref, contrast_ref, out_ref,
                   *, inv_temperature, tile_rows, n_valid, a_valid):
    step = pl.program_id(0)
    row0 = pl.multiple_of(step * tile_rows, tile_rows)

    contrast = contrast_ref[...]                              # [N_pad, D_pad] (resident)
    anchor = contrast_ref[pl.ds(row0, tile_rows), :]          # [TR, D_pad], anchor == contrast[:A]

    # anchor . contrast^T / T on the MXU with f32 accumulation.
    logits_raw = jax.lax.dot_general(
        anchor, contrast, (((1,), (1,)), ((), ())),
        preferred_element_type=jnp.float32) * inv_temperature  # [TR, N_pad]

    tr, n_pad = logits_raw.shape
    row_ids = jax.lax.broadcasted_iota(jnp.int32, (tr, n_pad), 0) + row0
    col_ids = jax.lax.broadcasted_iota(jnp.int32, (tr, n_pad), 1)
    # Exclude self-contrast and zero-padded contrast columns.
    logits_mask = (row_ids != col_ids) & (col_ids < n_valid)            # bool [TR, N_pad]
    pos_mask = (lab_col_ref[...] == lab_row_ref[...]) & logits_mask     # bool [TR, N_pad]

    # Row max over every column (padded cols have raw logit 0 <= self-logit, so
    # this equals the reference's max; log_prob is shift-invariant anyway).
    row_max = jnp.max(logits_raw, axis=1, keepdims=True)                # [TR, 1]
    logits = logits_raw - row_max                                       # <= 0 on valid cols

    # VPU/XLU reductions (no MXU matvecs).
    exp_logits = jnp.where(logits_mask, jnp.exp(logits), 0.0)
    denom = jnp.sum(exp_logits, axis=1, keepdims=True)                  # [TR, 1]
    pos_dot = jnp.sum(jnp.where(pos_mask, logits, 0.0), axis=1, keepdims=True)

    pos_cnt = cnt_col_ref[...]                                          # [TR, 1] (precomputed)
    # sum_j pos*(logits - log denom) / sum_j pos  (0/0 -> NaN like PyTorch ref)
    mlpp = (pos_dot - jnp.log(denom) * pos_cnt) / pos_cnt               # [TR, 1]

    row_valid = (jax.lax.broadcasted_iota(jnp.int32, (tr, 1), 0) + row0) < a_valid
    out_ref[...] = jnp.where(row_valid, mlpp, 0.0)


def _round_up(x, m):
    return (x + m - 1) // m * m


def _pick_tile_rows(a_rows, n_pad, d_pad, feat_bytes, budget_bytes=40 * 1024 * 1024):
    """Largest row tile from {512..8} whose live VMEM estimate fits the budget."""
    cap = _round_up(max(a_rows, 8), 8)
    resident = 2 * (n_pad * d_pad * feat_bytes + n_pad * 4)   # conservative: double-buffered
    for tr in (512, 256, 128, 64, 32, 16, 8):
        if tr > cap:
            continue
        live = resident + 6 * tr * n_pad * 4 + tr * d_pad * feat_bytes
        if live <= budget_bytes:
            return tr
    return 8


def supcon_loss(features, labels=None, mask=None, *, temperature=0.07,
                contrast_mode='all', base_temperature=0.07, matmul_dtype=None):
    """Pallas-TPU forward of SupConLoss_orginal. Returns a scalar loss."""
    if features.ndim < 3:
        raise ValueError('`features` needs to be [bsz, n_views, ...]')
    bsz, n_views = features.shape[0], features.shape[1]
    feats = features.reshape(bsz, n_views, -1)
    d = feats.shape[-1]

    if labels is not None and mask is not None:
        raise ValueError('Cannot define both `labels` and `mask`')
    if mask is not None:
        # TODO(synk): arbitrary precomputed [bsz, bsz] contrastive `mask` path not implemented.
        raise NotImplementedError('explicit `mask` argument not supported')
    if labels is None:
        labels = jnp.arange(bsz, dtype=jnp.int32)   # SimCLR: mask == eye(bsz)
    labels = labels.reshape(-1).astype(jnp.int32)
    if labels.shape[0] != bsz:
        raise ValueError('Num of labels does not match num of features')

    if contrast_mode == 'one':
        anchor_count = 1
    elif contrast_mode == 'all':
        anchor_count = n_views
    else:
        raise ValueError('Unknown mode: {}'.format(contrast_mode))

    n = n_views * bsz
    a = anchor_count * bsz

    # torch.cat(torch.unbind(features, 1), 0): [view0 rows; view1 rows; ...]
    contrast = jnp.swapaxes(feats, 0, 1).reshape(n, d)
    if matmul_dtype is not None:
        contrast = contrast.astype(matmul_dtype)    # e.g. bf16 MXU operands, f32 accumulation
    feat_bytes = contrast.dtype.itemsize

    d_pad = _round_up(d, 128)
    n_pad0 = _round_up(n, 128)
    tr = _pick_tile_rows(a, n_pad0, d_pad, feat_bytes)
    a_pad = _round_up(a, tr)
    n_pad = max(n_pad0, _round_up(a_pad, 128))      # anchor slice must stay in-bounds
    grid = (a_pad // tr,)
    # TODO(synk): for N*D + [TR,N] temporaries exceeding VMEM, add an inner
    # contrast-column grid axis with online (flash-style) logsumexp accumulation.

    # Zero-pad features; padded columns/rows are masked inside the kernel.
    contrast_p = jnp.zeros((n_pad, d_pad), contrast.dtype).at[:n, :d].set(contrast)

    labels_big = jnp.tile(labels, n_views)                               # [N]
    lab_row = jnp.full((1, n_pad), -1, jnp.int32).at[0, :n].set(labels_big)
    lab_col = jnp.full((a_pad, 1), -1, jnp.int32).at[:a, 0].set(labels_big[:a])

    # pos_cnt_i = n_views * (#samples sharing label_i) - 1  (self excluded).
    counts = jnp.sum(labels[:, None] == labels[None, :], axis=1).astype(jnp.float32)
    pos_cnt = jnp.tile(n_views * counts - 1.0, anchor_count)             # [A]
    cnt_col = jnp.ones((a_pad, 1), jnp.float32).at[:a, 0].set(pos_cnt)

    kernel = functools.partial(
        _supcon_kernel,
        inv_temperature=float(1.0 / temperature),
        tile_rows=tr, n_valid=n, a_valid=a)

    def _run(single_buffer_resident):
        resident_kw = (dict(pipeline_mode=pl.Buffered(1))
                       if single_buffer_resident else {})
        grid_spec = pltpu.PrefetchScalarGridSpec(
            num_scalar_prefetch=0,
            grid=grid,
            in_specs=[
                pl.BlockSpec((tr, 1), lambda i: (i, 0)),                   # anchor labels (streamed)
                pl.BlockSpec((tr, 1), lambda i: (i, 0)),                   # positive counts (streamed)
                pl.BlockSpec((1, n_pad), lambda i: (0, 0), **resident_kw),        # all labels (resident)
                pl.BlockSpec((n_pad, d_pad), lambda i: (0, 0), **resident_kw),    # contrast feats (resident)
            ],
            out_specs=pl.BlockSpec((tr, 1), lambda i: (i, 0)),
        )
        out = pl.pallas_call(
            kernel,
            out_shape=jax.ShapeDtypeStruct((a_pad, 1), jnp.float32),
            grid_spec=grid_spec,
            compiler_params=pltpu.CompilerParams(
                dimension_semantics=("parallel",),
                vmem_limit_bytes=64 * 1024 * 1024),
        )(lab_col, cnt_col, lab_row, contrast_p)
        return jax.block_until_ready(out)

    try:
        mlpp = _run(True)     # single-buffer the resident blocks (halves their VMEM)
    except Exception:         # pipeline_mode / Buffered(1) unsupported -> default buffering
        mlpp = _run(False)

    return (-(temperature / base_temperature) / a) * jnp.sum(mlpp)


def _reference_numpy(features, labels, temperature=0.07, contrast_mode='all',
                     base_temperature=0.07):
    """Mirrors the PyTorch forward exactly, in fp64."""
    feats = np.asarray(features, np.float64)
    bsz, n_views = feats.shape[0], feats.shape[1]
    feats = feats.reshape(bsz, n_views, -1)
    labels = np.asarray(labels).reshape(-1, 1)
    mask = (labels == labels.T).astype(np.float64)
    contrast = np.concatenate([feats[:, v, :] for v in range(n_views)], axis=0)
    if contrast_mode == 'one':
        anchor, anchor_count = feats[:, 0], 1
    else:
        anchor, anchor_count = contrast, n_views
    adc = anchor @ contrast.T / temperature
    logits = adc - adc.max(axis=1, keepdims=True)
    mask_big = np.tile(mask, (anchor_count, n_views))
    A = anchor_count * bsz
    logits_mask = np.ones_like(mask_big)
    logits_mask[np.arange(A), np.arange(A)] = 0
    mask_big = mask_big * logits_mask
    exp_logits = np.exp(logits) * logits_mask
    log_prob = logits - np.log(exp_logits.sum(1, keepdims=True))
    mean_log_prob_pos = (mask_big * log_prob).sum(1) / mask_big.sum(1)
    loss = -(temperature / base_temperature) * mean_log_prob_pos
    return loss.reshape(anchor_count, bsz).mean()


if __name__ == "__main__":
    key = jax.random.PRNGKey(0)
    k1, k2, k3, k4 = jax.random.split(key, 4)

    # Case 1: supervised, 'all' mode, f32 (tight check).
    bsz, n_views, d = 8, 2, 32
    feats = jax.random.normal(k1, (bsz, n_views, d), dtype=jnp.float32)
    feats = feats / jnp.linalg.norm(feats, axis=-1, keepdims=True)
    labels = jax.random.randint(k2, (bsz,), 0, 3, dtype=jnp.int32)
    loss = jax.block_until_ready(supcon_loss(feats, labels))
    ref = _reference_numpy(np.asarray(feats), np.asarray(labels))
    np.testing.assert_allclose(np.asarray(loss), ref, rtol=2e-3, atol=2e-3)

    # Case 2: same inputs with bf16 MXU operands (loose check).
    loss_bf16 = jax.block_until_ready(
        supcon_loss(feats, labels, matmul_dtype=jnp.bfloat16))
    np.testing.assert_allclose(np.asarray(loss_bf16), ref, rtol=5e-2, atol=2e-1)

    # Case 3: multi-step grid + padded anchor rows (A=48 -> TR=32, grid=2).
    bszl, dl = 24, 32
    featsl = jax.random.normal(k3, (bszl, n_views, dl), dtype=jnp.float32)
    featsl = featsl / jnp.linalg.norm(featsl, axis=-1, keepdims=True)
    labelsl = jax.random.randint(k4, (bszl,), 0, 4, dtype=jnp.int32)
    lossl = jax.block_until_ready(supcon_loss(featsl, labelsl))
    refl = _reference_numpy(np.asarray(featsl), np.asarray(labelsl))
    np.testing.assert_allclose(np.asarray(lossl), refl, rtol=2e-3, atol=2e-3)

    # Case 4: ragged shapes, contrast_mode='one', plus the SimCLR (labels=None) path.
    bszr, dr = 5, 20
    featsr = jax.random.normal(k2, (bszr, n_views, dr), dtype=jnp.float32)
    featsr = featsr / jnp.linalg.norm(featsr, axis=-1, keepdims=True)
    labelsr = jax.random.randint(k3, (bszr,), 0, 2, dtype=jnp.int32)
    loss_one = jax.block_until_ready(supcon_loss(featsr, labelsr, contrast_mode='one'))
    ref_one = _reference_numpy(np.asarray(featsr), np.asarray(labelsr), contrast_mode='one')
    np.testing.assert_allclose(np.asarray(loss_one), ref_one, rtol=2e-3, atol=2e-3)

    loss_simclr = jax.block_until_ready(supcon_loss(featsr))
    ref_simclr = _reference_numpy(np.asarray(featsr), np.arange(bszr))
    np.testing.assert_allclose(np.asarray(loss_simclr), ref_simclr, rtol=2e-3, atol=2e-3)

    print("KERNEL_OK")
</pallas_src>

<mosaic_0001>
module attributes {stable_mosaic.version = 11 : i64} {
  func.func @_supcon_kernel(%arg0: i32, %arg1: memref<16x1xi32, #tpu.memory_space<vmem>>, %arg2: memref<16x1xf32, #tpu.memory_space<vmem>>, %arg3: memref<1x128xi32, #tpu.memory_space<vmem>>, %arg4: memref<128x128xf32, #tpu.memory_space<vmem>>, %arg5: memref<16x1xf32, #tpu.memory_space<vmem>>) attributes {dimension_semantics = [#tpu.dimension_semantics<parallel>], iteration_bounds = array<i64: 1>, scalar_prefetch = 0 : i64, scratch_operands = 0 : i64, tpu.core_type = #tpu.core_type<tc>, window_params = [{transform_indices = @transform_0, window_bounds = array<i64: 16, 1>}, {transform_indices = @transform_1, window_bounds = array<i64: 16, 1>}, {pipeline_mode = #tpu.pipeline_mode<synchronous>, transform_indices = @transform_2, window_bounds = array<i64: 1, 128>}, {pipeline_mode = #tpu.pipeline_mode<synchronous>, transform_indices = @transform_3, window_bounds = array<i64: 128, 128>}, {transform_indices = @transform_4, window_bounds = array<i64: 16, 1>}]} {
    %c16_i32 = arith.constant 16 : i32
    %0 = arith.muli %arg0, %c16_i32 : i32
    %1 = tpu.assume_multiple %0, 16 : i32
    %c0 = arith.constant 0 : index
    %c0_0 = arith.constant 0 : index
    %2 = vector.load %arg4[%c0, %c0_0] : memref<128x128xf32, #tpu.memory_space<vmem>>, vector<128x128xf32>
    %3 = arith.index_cast %1 : i32 to index
    %c0_1 = arith.constant 0 : index
    %4 = vector.load %arg4[%3, %c0_1] : memref<128x128xf32, #tpu.memory_space<vmem>>, vector<16x128xf32>
    %cst = arith.constant dense<0.000000e+00> : vector<16x128xf32>
    %5 = tpu.matmul %4, %2, %cst {dimension_numbers = #tpu.dot_dimension_numbers<[1], [1], [0], [0], [0, 0, 1, 0], [], []>} : vector<16x128xf32>, vector<128x128xf32>, vector<16x128xf32> -> vector<16x128xf32>
    %cst_2 = arith.constant 14.2857141 : f32
    %6 = vector.broadcast %cst_2 : f32 to vector<16x128xf32>
    %7 = arith.mulf %5, %6 : vector<16x128xf32>
    %8 = tpu.iota {dimensions = array<i32: 0>} : vector<16x128xi32>
    %9 = vector.broadcast %1 : i32 to vector<16x128xi32>
    %10 = arith.addi %8, %9 : vector<16x128xi32>
    %11 = tpu.iota {dimensions = array<i32: 1>} : vector<16x128xi32>
    %12 = arith.cmpi ne, %10, %11 : vector<16x128xi32>
    %c16_i32_3 = arith.constant 16 : i32
    %13 = vector.broadcast %c16_i32_3 : i32 to vector<16x128xi32>
    %14 = arith.cmpi slt, %11, %13 : vector<16x128xi32>
    %15 = arith.andi %12, %14 : vector<16x128xi1>
    %c0_4 = arith.constant 0 : index
    %c0_5 = arith.constant 0 : index
    %16 = vector.load %arg1[%c0_4, %c0_5] : memref<16x1xi32, #tpu.memory_space<vmem>>, vector<16x1xi32>
    %c0_6 = arith.constant 0 : index
    %c0_7 = arith.constant 0 : index
    %17 = vector.load %arg3[%c0_6, %c0_7] : memref<1x128xi32, #tpu.memory_space<vmem>>, vector<1x128xi32>
    %18 = vector.broadcast %16 : vector<16x1xi32> to vector<16x128xi32>
    %19 = vector.broadcast %17 : vector<1x128xi32> to vector<16x128xi32>
    %20 = arith.cmpi eq, %18, %19 : vector<16x128xi32>
    %21 = arith.andi %20, %15 : vector<16x128xi1>
    %cst_8 = arith.constant dense<0xFF800000> : vector<16xf32>
    %22 = vector.multi_reduction <maximumf>, %7, %cst_8 [1] : vector<16x128xf32> to vector<16xf32>
    %23 = vector.shape_cast %22 : vector<16xf32> to vector<16x1xf32>
    %24 = vector.broadcast %23 : vector<16x1xf32> to vector<16x128xf32>
    %25 = arith.subf %7, %24 : vector<16x128xf32>
    %26 = math.exp %25 : vector<16x128xf32>
    %cst_9 = arith.constant 0.000000e+00 : f32
    %27 = vector.broadcast %cst_9 : f32 to vector<16x128xf32>
    %28 = arith.select %15, %26, %27 : vector<16x128xi1>, vector<16x128xf32>
    %cst_10 = arith.constant dense<0.000000e+00> : vector<16xf32>
    %29 = vector.multi_reduction <add>, %28, %cst_10 [1] : vector<16x128xf32> to vector<16xf32>
    %30 = vector.shape_cast %29 : vector<16xf32> to vector<16x1xf32>
    %cst_11 = arith.constant 0.000000e+00 : f32
    %31 = vector.broadcast %cst_11 : f32 to vector<16x128xf32>
    %32 = arith.select %21, %25, %31 : vector<16x128xi1>, vector<16x128xf32>
    %cst_12 = arith.constant dense<0.000000e+00> : vector<16xf32>
    %33 = vector.multi_reduction <add>, %32, %cst_12 [1] : vector<16x128xf32> to vector<16xf32>
    %34 = vector.shape_cast %33 : vector<16xf32> to vector<16x1xf32>
    %c0_13 = arith.constant 0 : index
    %c0_14 = arith.constant 0 : index
    %35 = vector.load %arg2[%c0_13, %c0_14] : memref<16x1xf32, #tpu.memory_space<vmem>>, vector<16x1xf32>
    %36 = math.log %30 : vector<16x1xf32>
    %37 = arith.mulf %36, %35 : vector<16x1xf32>
    %38 = arith.subf %34, %37 : vector<16x1xf32>
    %39 = arith.divf %38, %35 : vector<16x1xf32>
    %40 = tpu.iota {dimensions = array<i32: 0>} : vector<16x1xi32>
    %41 = vector.broadcast %1 : i32 to vector<16x1xi32>
    %42 = arith.addi %40, %41 : vector<16x1xi32>
    %c16_i32_15 = arith.constant 16 : i32
    %43 = vector.broadcast %c16_i32_15 : i32 to vector<16x1xi32>
    %44 = arith.cmpi slt, %42, %43 : vector<16x1xi32>
    %cst_16 = arith.constant 0.000000e+00 : f32
    %45 = vector.broadcast %cst_16 : f32 to vector<16x1xf32>
    %46 = arith.select %44, %39, %45 : vector<16x1xi1>, vector<16x1xf32>
    %c0_17 = arith.constant 0 : index
    %c0_18 = arith.constant 0 : index
    %47 = vector.load %arg5[%c0_17, %c0_18] : memref<16x1xf32, #tpu.memory_space<vmem>>, vector<16x1xf32>
    tpu.vector_store %arg5[%c0_17, %c0_18], %46 {strides = array<i32>} : memref<16x1xf32, #tpu.memory_space<vmem>>, vector<16x1xf32>,
    return
  }
  func.func @transform_0(%arg0: i32) -> (i32, i32) {
    %c0_i32 = arith.constant 0 : i32
    %c0_i32_0 = arith.constant 0 : i32
    return %arg0, %c0_i32 : i32, i32
  }
  func.func @transform_1(%arg0: i32) -> (i32, i32) {
    %c0_i32 = arith.constant 0 : i32
    %c0_i32_0 = arith.constant 0 : i32
    return %arg0, %c0_i32 : i32, i32
  }
  func.func @transform_2(%arg0: i32) -> (i32, i32) {
    %c0_i32 = arith.constant 0 : i32
    %c0_i32_0 = arith.constant 0 : i32
    %c0_i32_1 = arith.constant 0 : i32
    return %c0_i32, %c0_i32_0 : i32, i32
  }
  func.func @transform_3(%arg0: i32) -> (i32, i32) {
    %c0_i32 = arith.constant 0 : i32
    %c0_i32_0 = arith.constant 0 : i32
    %c0_i32_1 = arith.constant 0 : i32
    return %c0_i32, %c0_i32_0 : i32, i32
  }
  func.func @transform_4(%arg0: i32) -> (i32, i32) {
    %c0_i32 = arith.constant 0 : i32
    %c0_i32_0 = arith.constant 0 : i32
    return %arg0, %c0_i32 : i32, i32
  }
}

module attributes {stable_mosaic.version = 11 : i64} {
  func.func @_supcon_kernel(%arg0: i32, %arg1: memref<16x1xi32, #tpu.memory_space<vmem>>, %arg2: memref<16x1xf32, #tpu.memory_space<vmem>>, %arg3: memref<1x128xi32, #tpu.memory_space<vmem>>, %arg4: memref<128x128xf32, #tpu.memory_space<vmem>>, %arg5: memref<16x1xf32, #tpu.memory_space<vmem>>) attributes {dimension_semantics = [#tpu.dimension_semantics<parallel>], iteration_bounds = array<i64: 1>, scalar_prefetch = 0 : i64, scratch_operands = 0 : i64, tpu.core_type = #tpu.core_type<tc>, window_params = [{transform_indices = @transform_0, window_bounds = array<i64: 16, 1>}, {transform_indices = @transform_1, window_bounds = array<i64: 16, 1>}, {pipeline_mode = #tpu.pipeline_mode<synchronous>, transform_indices = @transform_2, window_bounds = array<i64: 1, 128>}, {pipeline_mode = #tpu.pipeline_mode<synchronous>, transform_indices = @transform_3, window_bounds = array<i64: 128, 128>}, {transform_indices = @transform_4, window_bounds = array<i64: 16, 1>}]} {
    %c16_i32 = arith.constant 16 : i32
    %0 = arith.muli %arg0, %c16_i32 : i32
    %1 = tpu.assume_multiple %0, 16 : i32
    %c0 = arith.constant 0 : index
    %c0_0 = arith.constant 0 : index
    %2 = vector.load %arg4[%c0, %c0_0] : memref<128x128xf32, #tpu.memory_space<vmem>>, vector<128x128xf32>
    %3 = arith.index_cast %1 : i32 to index
    %c0_1 = arith.constant 0 : index
    %4 = vector.load %arg4[%3, %c0_1] : memref<128x128xf32, #tpu.memory_space<vmem>>, vector<16x128xf32>
    %cst = arith.constant dense<0.000000e+00> : vector<16x128xf32>
    %5 = tpu.matmul %4, %2, %cst {dimension_numbers = #tpu.dot_dimension_numbers<[1], [1], [0], [0], [0, 0, 1, 0], [], []>} : vector<16x128xf32>, vector<128x128xf32>, vector<16x128xf32> -> vector<16x128xf32>
    %cst_2 = arith.constant 14.2857141 : f32
    %6 = vector.broadcast %cst_2 : f32 to vector<16x128xf32>
    %7 = arith.mulf %5, %6 : vector<16x128xf32>
    %8 = tpu.iota {dimensions = array<i32: 0>} : vector<16x128xi32>
    %9 = vector.broadcast %1 : i32 to vector<16x128xi32>
    %10 = arith.addi %8, %9 : vector<16x128xi32>
    %11 = tpu.iota {dimensions = array<i32: 1>} : vector<16x128xi32>
    %12 = arith.cmpi ne, %10, %11 : vector<16x128xi32>
    %c16_i32_3 = arith.constant 16 : i32
    %13 = vector.broadcast %c16_i32_3 : i32 to vector<16x128xi32>
    %14 = arith.cmpi slt, %11, %13 : vector<16x128xi32>
    %15 = arith.andi %12, %14 : vector<16x128xi1>
    %c0_4 = arith.constant 0 : index
    %c0_5 = arith.constant 0 : index
    %16 = vector.load %arg1[%c0_4, %c0_5] : memref<16x1xi32, #tpu.memory_space<vmem>>, vector<16x1xi32>
    %c0_6 = arith.constant 0 : index
    %c0_7 = arith.constant 0 : index
    %17 = vector.load %arg3[%c0_6, %c0_7] : memref<1x128xi32, #tpu.memory_space<vmem>>, vector<1x128xi32>
    %18 = vector.broadcast %16 : vector<16x1xi32> to vector<16x128xi32>
    %19 = vector.broadcast %17 : vector<1x128xi32> to vector<16x128xi32>
    %20 = arith.cmpi eq, %18, %19 : vector<16x128xi32>
    %21 = arith.andi %20, %15 : vector<16x128xi1>
    %cst_8 = arith.constant dense<0xFF800000> : vector<16xf32>
    %22 = vector.multi_reduction <maximumf>, %7, %cst_8 [1] : vector<16x128xf32> to vector<16xf32>
    %23 = vector.shape_cast %22 : vector<16xf32> to vector<16x1xf32>
    %24 = vector.broadcast %23 : vector<16x1xf32> to vector<16x128xf32>
    %25 = arith.subf %7, %24 : vector<16x128xf32>
    %26 = math.exp %25 : vector<16x128xf32>
    %cst_9 = arith.constant 0.000000e+00 : f32
    %27 = vector.broadcast %cst_9 : f32 to vector<16x128xf32>
    %28 = arith.select %15, %26, %27 : vector<16x128xi1>, vector<16x128xf32>
    %cst_10 = arith.constant dense<0.000000e+00> : vector<16xf32>
    %29 = vector.multi_reduction <add>, %28, %cst_10 [1] : vector<16x128xf32> to vector<16xf32>
    %30 = vector.shape_cast %29 : vector<16xf32> to vector<16x1xf32>
    %cst_11 = arith.constant 0.000000e+00 : f32
    %31 = vector.broadcast %cst_11 : f32 to vector<16x128xf32>
    %32 = arith.select %21, %25, %31 : vector<16x128xi1>, vector<16x128xf32>
    %cst_12 = arith.constant dense<0.000000e+00> : vector<16xf32>
    %33 = vector.multi_reduction <add>, %32, %cst_12 [1] : vector<16x128xf32> to vector<16xf32>
    %34 = vector.shape_cast %33 : vector<16xf32> to vector<16x1xf32>
    %c0_13 = arith.constant 0 : index
    %c0_14 = arith.constant 0 : index
    %35 = vector.load %arg2[%c0_13, %c0_14] : memref<16x1xf32, #tpu.memory_space<vmem>>, vector<16x1xf32>
    %36 = math.log %30 : vector<16x1xf32>
    %37 = arith.mulf %36, %35 : vector<16x1xf32>
    %38 = arith.subf %34, %37 : vector<16x1xf32>
    %39 = arith.divf %38, %35 : vector<16x1xf32>
    %40 = tpu.iota {dimensions = array<i32: 0>} : vector<16x1xi32>
    %41 = vector.broadcast %1 : i32 to vector<16x1xi32>
    %42 = arith.addi %40, %41 : vector<16x1xi32>
    %c16_i32_15 = arith.constant 16 : i32
    %43 = vector.broadcast %c16_i32_15 : i32 to vector<16x1xi32>
    %44 = arith.cmpi slt, %42, %43 : vector<16x1xi32>
    %cst_16 = arith.constant 0.000000e+00 : f32
    %45 = vector.broadcast %cst_16 : f32 to vector<16x1xf32>
    %46 = arith.select %44, %39, %45 : vector<16x1xi1>, vector<16x1xf32>
    %c0_17 = arith.constant 0 : index
    %c0_18 = arith.constant 0 : index
    %47 = vector.load %arg5[%c0_17, %c0_18] : memref<16x1xf32, #tpu.memory_space<vmem>>, vector<16x1xf32>
    tpu.vector_store %arg5[%c0_17, %c0_18], %46 {strides = array<i32>} : memref<16x1xf32, #tpu.memory_space<vmem>>, vector<16x1xf32>,
    return
  }
  func.func @transform_0(%arg0: i32) -> (i32, i32) {
    %c0_i32 = arith.constant 0 : i32
    %c0_i32_0 = arith.constant 0 : i32
    return %arg0, %c0_i32 : i32, i32
  }
  func.func @transform_1(%arg0: i32) -> (i32, i32) {
    %c0_i32 = arith.constant 0 : i32
    %c0_i32_0 = arith.constant 0 : i32
    return %arg0, %c0_i32 : i32, i32
  }
  func.func @transform_2(%arg0: i32) -> (i32, i32) {
    %c0_i32 = arith.constant 0 : i32
    %c0_i32_0 = arith.constant 0 : i32
    %c0_i32_1 = arith.constant 0 : i32
    return %c0_i32, %c0_i32_0 : i32, i32
  }
  func.func @transform_3(%arg0: i32) -> (i32, i32) {
    %c0_i32 = arith.constant 0 : i32
    %c0_i32_0 = arith.constant 0 : i32
    %c0_i32_1 = arith.constant 0 : i32
    return %c0_i32, %c0_i32_0 : i32, i32
  }
  func.func @transform_4(%arg0: i32) -> (i32, i32) {
    %c0_i32 = arith.constant 0 : i32
    %c0_i32_0 = arith.constant 0 : i32
    return %arg0, %c0_i32 : i32, i32
  }
}

</mosaic_0001>

<llo_original>
// kernel: tpu_custom_call.1
$region0: #{tpu_custom_call.1}
  #allocation0 [shape = 'u32[]', space=smem, size = 0x4, offset = 0x4, fixed_abs, tag = 'smem constant byte address 0x4 - core index']
  #allocation1 [shape = 'u32[144,128]{1,0:T(1,128)}', space=vmem, size = 0x12000, scoped, tag = 'internal scratch']
  %s0 = inlined_call_operand.vmem [shape: s32[16,1], index: 0, kind: input, shape index: {}]
  %s1 = inlined_call_operand.vmem [shape: f32[16,1], index: 1, kind: input, shape index: {}]
  %s2 = inlined_call_operand.vmem [shape: s32[1,128], index: 2, kind: input, shape index: {}]
  %s3 = inlined_call_operand.hbm [shape: f32[128,128], index: 3, kind: input, shape index: {}]
  %s4 = inlined_call_operand.vmem [shape: f32[16,1], index: 4, kind: output, shape index: {}]
  %s5 = sld [smem:[#allocation0]]
  $region30: #{tpu_custom_call.1} parent=0
    _
  %s7 = ssub.s32 1, %s5
  %s8 = scalar_select 0, %s7, %s5
  $region1: #{tpu_custom_call.1} parent=0
    #allocation2 [shape = 'u8[65536]{0}', space=vmem, size = 0x10000, scoped, tag = 'input window, operand 3, single buffered']
    #allocation3 [shape = 's32[1]{0}', space=sflag, size = 0x4, scoped, tag = 'scoped memory for tpu_custom_call.1']
    %9 = vsyncpa [#allocation3], 0
    // Predicated region
    $region2: #{tpu_custom_call.1} parent=1 // pred_check
      _
    $region3: #{tpu_custom_call.1} parent=1 // pred_check_branch
      %11 = sbr.rel (0) target = $region5
    $region4: #{tpu_custom_call.1} parent=1 // pred_region
      _
    $region5: #{tpu_custom_call.1} parent=1 // pred_fallthru
      _
    // Predicated region
    $region6: #{tpu_custom_call.1} parent=1 // pred_check
      _
    $region7: #{tpu_custom_call.1} parent=1 // pred_check_branch
      %13 = sbr.rel (0) target = $region9
    $region8: #{tpu_custom_call.1} parent=1 // pred_region
      _
    $region9: #{tpu_custom_call.1} parent=1 // pred_fallthru
      _
    // Predicated region
    $region10: #{tpu_custom_call.1} parent=1 // pred_check
      _
    $region11: #{tpu_custom_call.1} parent=1 // pred_check_branch
      %15 = sbr.rel (0) target = $region13
    $region12: #{tpu_custom_call.1} parent=1 // pred_region
      _
    $region13: #{tpu_custom_call.1} parent=1 // pred_fallthru
      _
    // Predicated region
    $region14: #{tpu_custom_call.1} parent=1 // pred_check
      _
    $region15: #{tpu_custom_call.1} parent=1 // pred_check_branch
      %17 = sbr.rel (0) target = $region17
    $region16: #{tpu_custom_call.1} parent=1 // pred_region
      %s19 = ssub.s32 2048, 2048
      %20 = vsyncadd [#allocation3], %s19
      %s21 = sshll.u32 [#allocation2], 4
      %s22 = int_to_ptr.vmem [resolvable:$true] %s21
      %27 = dma.hbm_to_vmem [thread:$0]  %s3, 2048, %s22, [#allocation3], 128, 128, 8
    $region17: #{tpu_custom_call.1} parent=1 // pred_fallthru
      _
    // Predicated region
    $region18: #{tpu_custom_call.1} parent=1 // pred_check
      _
    $region19: #{tpu_custom_call.1} parent=1 // pred_check_branch
      %29 = sbr.rel (0) target = $region21
    $region20: #{tpu_custom_call.1} parent=1 // pred_region
      %30 = dma.done [#allocation3], 2048
    $region21: #{tpu_custom_call.1} parent=1 // pred_fallthru
      _
    %s31 = smul.u32 0, 16
    %v32 = vld [vmem:[#allocation2] sm:$0xff]
    %v33 = vld [vmem:[#allocation2 + $0x8] sm:$0xff]
    %v34 = vld [vmem:[#allocation2 + $0x10] sm:$0xff]
    %v35 = vld [vmem:[#allocation2 + $0x18] sm:$0xff]
    %v36 = vld [vmem:[#allocation2 + $0x20] sm:$0xff]
    %v37 = vld [vmem:[#allocation2 + $0x28] sm:$0xff]
    %v38 = vld [vmem:[#allocation2 + $0x30] sm:$0xff]
    %v39 = vld [vmem:[#allocation2 + $0x38] sm:$0xff]
    %v40 = vld [vmem:[#allocation2 + $0x40] sm:$0xff]
    %v41 = vld [vmem:[#allocation2 + $0x48] sm:$0xff]
    %v42 = vld [vmem:[#allocation2 + $0x50] sm:$0xff]
    %v43 = vld [vmem:[#allocation2 + $0x58] sm:$0xff]
    %v44 = vld [vmem:[#allocation2 + $0x60] sm:$0xff]
    %v45 = vld [vmem:[#allocation2 + $0x68] sm:$0xff]
    %v46 = vld [vmem:[#allocation2 + $0x70] sm:$0xff]
    %v47 = vld [vmem:[#allocation2 + $0x78] sm:$0xff]
    %s48 = scalar_lea.vmem [#allocation2], %s31
    %v49 = vld [vmem:[%s48] sm:$0xff]
    %v50 = vld [vmem:[%s48 + $0x8] sm:$0xff]
    %51 = vmatprep.subr.mxu0 0.0
    %52 = vmatpush1.xpose.msra.mxu0 %v47
    %53 = vmatprep.subr.mxu0 0.0
    %54 = vmatpush1.xpose.msra.mxu0 %v46
    %55 = vmatprep.subr.mxu0 0.0
    %56 = vmatpush1.xpose.msra.mxu0 %v45
    %57 = vmatprep.subr.mxu0 0.0
    %58 = vmatpush1.xpose.msra.mxu0 %v44
    %59 = vmatprep.subr.mxu0 0.0
    %60 = vmatpush1.xpose.msra.mxu0 %v43
    %61 = vmatprep.subr.mxu0 0.0
    %62 = vmatpush1.xpose.msra.mxu0 %v42
    %63 = vmatprep.subr.mxu0 0.0
    %64 = vmatpush1.xpose.msra.mxu0 %v41
    %65 = vmatprep.subr.mxu0 0.0
    %66 = vmatpush1.xpose.msra.mxu0 %v40
    %67 = vmatprep.subr.mxu0 0.0
    %68 = vmatpush1.xpose.msra.mxu0 %v39
    %69 = vmatprep.subr.mxu0 0.0
    %70 = vmatpush1.xpose.msra.mxu0 %v38
    %71 = vmatprep.subr.mxu0 0.0
    %72 = vmatpush1.xpose.msra.mxu0 %v37
    %73 = vmatprep.subr.mxu0 0.0
    %74 = vmatpush1.xpose.msra.mxu0 %v36
    %75 = vmatprep.subr.mxu0 0.0
    %76 = vmatpush1.xpose.msra.mxu0 %v35
    %77 = vmatprep.subr.mxu0 0.0
    %78 = vmatpush1.xpose.msra.mxu0 %v34
    %79 = vmatprep.subr.mxu0 0.0
    %80 = vmatpush1.xpose.msra.mxu0 %v33
    %81 = vmatprep.subr.mxu0 0.0
    %82 = vmatpush1.xpose.msra.mxu0 %v32
    %83 = vmatprep.subr.mxu0 0.0
    %84 = vmatpush2.xpose.msra.mxu0 0.0
    %85 = vmatprep.subr.mxu0 0.0
    %86 = vmatpush2.xpose.msra.mxu0 0.0
    %87 = vmatprep.subr.mxu0 0.0
    %88 = vmatpush2.xpose.msra.mxu0 0.0
    %89 = vmatprep.subr.mxu0 0.0
    %90 = vmatpush2.xpose.msra.mxu0 0.0
    %91 = vmatprep.subr.mxu0 0.0
    %92 = vmatpush2.xpose.msra.mxu0 0.0
    %93 = vmatprep.subr.mxu0 0.0
    %94 = vmatpush2.xpose.msra.mxu0 0.0
    %95 = vmatprep.subr.mxu0 0.0
    %96 = vmatpush2.xpose.msra.mxu0 0.0
    %97 = vmatprep.subr.mxu0 0.0
    %98 = vmatpush2.xpose.msra.mxu0 0.0
    %99 = vmatprep.subr.mxu0 0.0
    %100 = vmatpush2.xpose.msra.mxu0 0.0
    %101 = vmatprep.subr.mxu0 0.0
    %102 = vmatpush2.xpose.msra.mxu0 0.0
    %103 = vmatprep.subr.mxu0 0.0
    %104 = vmatpush2.xpose.msra.mxu0 0.0
    %105 = vmatprep.subr.mxu0 0.0
    %106 = vmatpush2.xpose.msra.mxu0 0.0
    %107 = vmatprep.subr.mxu0 0.0
    %108 = vmatpush2.xpose.msra.mxu0 0.0
    %109 = vmatprep.subr.mxu0 0.0
    %110 = vmatpush2.xpose.msra.mxu0 0.0
    %111 = vmatprep.subr.mxu0 0.0
    %112 = vmatpush2.xpose.msra.mxu0 0.0
    %113 = vmatprep.subr.mxu0 0.0
    %114 = vmatpush2.xpose.msra.mxu0 0.0
    %115 = vmatprep.mubr.f32.mxu0 0.0
    %116 = vmatmul.mubr.f32.gmra.mxu0 %v49
    %v117 = vpop.f32.mrf.mxu0
    %v118 = vadd.f32 0.0, %v117
    %v119 = vpop.f32.mrf.mxu0
    %120 = vmatprep.mubr.f32.mxu0 0.0
    %121 = vmatmul.mubr.f32.gmra.mxu0 %v50
    %v122 = vpop.f32.mrf.mxu0
    %v123 = vadd.f32 0.0, %v122
    %v124 = vpop.f32.mrf.mxu0
    %125 = vdwg.mxu0
    %v126 = vmul.f32 %v118, 14.285714
    %v127 = vmul.f32 %v123, 14.285714
    %v128 = vlaneseq
    %v129 = vshrl.u32 %v128, 7
    %v130 = vadd.s32 %v129, 8
    %v131 = vstv %s31
    %v132 = vadd.s32 %v129, %v131
    %v133 = vadd.s32 %v130, %v131
    %v134 = vlaneseq
    %v135 = vand.u32 %v134, 127
    %vm136 = vcmp.ne.s32.totalorder %v132, %v135
    %vm137 = vcmp.ne.s32.totalorder %v133, %v135
    %vm138 = vcmp.lt.s32.totalorder %v135, 16
    %vm139 = vmand %vm136, %vm138
    %vm140 = vmand %vm137, %vm138
    %v141 = vld [vmem:[%s0] sm:$0xff]
    %v142 = vld [vmem:[%s0 + $0x8] sm:$0xff]
    %v143 = vld [vmem:[%s2] sm:$0x1]
    %144 = vset.pattern.permute.xlu0 0
    %145 = vperm.xlu0 %144, %v141
    %v146 = vpop.permute.xlu0 %145
    %147 = vset.pattern.permute.xlu0 0
    %148 = vperm.xlu0 %147, %v142
    %v149 = vpop.permute.xlu0 %148
    %v150 = vlaneseq
    %v151 = vshrl.u32 %v150, 7
    %v152 = vsub.s32 0, %v151
    %v153 = vrot.slane %v143, %v152
    %vm154 = vcmp.eq.s32.totalorder %v146, %v153
    %vm155 = vcmp.eq.s32.totalorder %v149, %v153
    %vm156 = vmand %vm154, %vm139
    %vm157 = vmand %vm155, %vm140
    %158 = vmax.xlane.f32.xlu0 %v126
    %v159 = vpop.xlane.xlu0 %158
    %160 = vmax.xlane.f32.xlu0 %v127
    %v161 = vpop.xlane.xlu0 %160
    %v162 = vsub.f32 %v126, %v159
    %v163 = vsub.f32 %v127, %v161
    %v164 = vmul.f32 %v162, 1.442695
    %v165 = vpow.pop %v164
    %v166 = vmul.f32 %v163, 1.442695
    %v167 = vpow.pop %v166
    %v168 = vsel %vm139, %v165, 0.0
    %v169 = vsel %vm140, %v167, 0.0
    %170 = vadd.xlane.f32.xlu0 %v168
    %v171 = vpop.xlane.xlu0 %170
    %172 = vadd.xlane.f32.xlu0 %v169
    %v173 = vpop.xlane.xlu0 %172
    %v174 = vsel %vm156, %v162, 0.0
    %v175 = vsel %vm157, %v163, 0.0
    %176 = vadd.xlane.f32.xlu0 %v174
    %v177 = vpop.xlane.xlu0 %176
    %178 = vadd.xlane.f32.xlu0 %v175
    %v179 = vpop.xlane.xlu0 %178
    %v180 = vld [vmem:[%s1] sm:$0xff]
    %v181 = vld [vmem:[%s1 + $0x8] sm:$0xff]
    %v182 = vlog2.pop %v171
    %v183 = vmul.f32 %v182, 0.6931472
    %v184 = vlog2.pop %v173
    %v185 = vmul.f32 %v184, 0.6931472
    %v186 = vmul.f32 %v183, %v180
    %v187 = vmul.f32 %v185, %v181
    %v188 = vsub.f32 %v177, %v186
    %v189 = vsub.f32 %v179, %v187
    %v190 = vrcp.pop %v180
    %v191 = vmul.f32 %v188, %v190
    %v192 = vrcp.pop %v181
    %v193 = vmul.f32 %v189, %v192
    %vm194 = vcmp.lt.s32.totalorder %v132, 16
    %vm195 = vcmp.lt.s32.totalorder %v133, 16
    %v196 = vsel %vm194, %v191, 0.0
    %v197 = vsel %vm195, %v193, 0.0
    %vm198 = vcmask 7168
    %199 = vst.msk [vmem:[%s4] sm:$0xff] %vm198, %v196
    %200 = vst.msk [vmem:[%s4 + $0x8] sm:$0xff] %vm198, %v197
    // Predicated region
    $region22: #{tpu_custom_call.1} parent=1 // pred_check
      _
    $region23: #{tpu_custom_call.1} parent=1 // pred_check_branch
      %202 = sbr.rel (0) target = $region25
    $region24: #{tpu_custom_call.1} parent=1 // pred_region
      _
    $region25: #{tpu_custom_call.1} parent=1 // pred_fallthru
      _
    // Predicated region
    $region26: #{tpu_custom_call.1} parent=1 // pred_check
      _
    $region27: #{tpu_custom_call.1} parent=1 // pred_check_branch
      %204 = sbr.rel (0) target = $region29
    $region28: #{tpu_custom_call.1} parent=1 // pred_region
      _
    $region29: #{tpu_custom_call.1} parent=1 // pred_fallthru
      _
    %205 = vsyncpa [#allocation3], 1

// kernel: tpu_custom_call.1
$region0: #{tpu_custom_call.1}
  #allocation0 [shape = 'u32[]', space=smem, size = 0x4, offset = 0x4, fixed_abs, tag = 'smem constant byte address 0x4 - core index']
  #allocation1 [shape = 'u32[144,128]{1,0:T(1,128)}', space=vmem, size = 0x12000, scoped, tag = 'internal scratch']
  %s0 = inlined_call_operand.vmem [shape: s32[16,1], index: 0, kind: input, shape index: {}]
  %s1 = inlined_call_operand.vmem [shape: f32[16,1], index: 1, kind: input, shape index: {}]
  %s2 = inlined_call_operand.vmem [shape: s32[1,128], index: 2, kind: input, shape index: {}]
  %s3 = inlined_call_operand.hbm [shape: f32[128,128], index: 3, kind: input, shape index: {}]
  %s4 = inlined_call_operand.vmem [shape: f32[16,1], index: 4, kind: output, shape index: {}]
  %s5 = sld [smem:[#allocation0]]
  $region30: #{tpu_custom_call.1} parent=0
    _
  %s7 = ssub.s32 1, %s5
  %s8 = scalar_select 0, %s7, %s5
  $region1: #{tpu_custom_call.1} parent=0
    #allocation2 [shape = 'u8[65536]{0}', space=vmem, size = 0x10000, scoped, tag = 'input window, operand 3, single buffered']
    #allocation3 [shape = 's32[1]{0}', space=sflag, size = 0x4, scoped, tag = 'scoped memory for tpu_custom_call.1']
    %9 = vsyncpa [#allocation3], 0
    // Predicated region
    $region2: #{tpu_custom_call.1} parent=1 // pred_check
      _
    $region3: #{tpu_custom_call.1} parent=1 // pred_check_branch
      %11 = sbr.rel (0) target = $region5
    $region4: #{tpu_custom_call.1} parent=1 // pred_region
      _
    $region5: #{tpu_custom_call.1} parent=1 // pred_fallthru
      _
    // Predicated region
    $region6: #{tpu_custom_call.1} parent=1 // pred_check
      _
    $region7: #{tpu_custom_call.1} parent=1 // pred_check_branch
      %13 = sbr.rel (0) target = $region9
    $region8: #{tpu_custom_call.1} parent=1 // pred_region
      _
    $region9: #{tpu_custom_call.1} parent=1 // pred_fallthru
      _
    // Predicated region
    $region10: #{tpu_custom_call.1} parent=1 // pred_check
      _
    $region11: #{tpu_custom_call.1} parent=1 // pred_check_branch
      %15 = sbr.rel (0) target = $region13
    $region12: #{tpu_custom_call.1} parent=1 // pred_region
      _
    $region13: #{tpu_custom_call.1} parent=1 // pred_fallthru
      _
    // Predicated region
    $region14: #{tpu_custom_call.1} parent=1 // pred_check
      _
    $region15: #{tpu_custom_call.1} parent=1 // pred_check_branch
      %17 = sbr.rel (0) target = $region17
    $region16: #{tpu_custom_call.1} parent=1 // pred_region
      %s19 = ssub.s32 2048, 2048
      %20 = vsyncadd [#allocation3], %s19
      %s21 = sshll.u32 [#allocation2], 4
      %s22 = int_to_ptr.vmem [resolvable:$true] %s21
      %27 = dma.hbm_to_vmem [thread:$0]  %s3, 2048, %s22, [#allocation3], 128, 128, 8
    $region17: #{tpu_custom_call.1} parent=1 // pred_fallthru
      _
    // Predicated region
    $region18: #{tpu_custom_call.1} parent=1 // pred_check
      _
    $region19: #{tpu_custom_call.1} parent=1 // pred_check_branch
      %29 = sbr.rel (0) target = $region21
    $region20: #{tpu_custom_call.1} parent=1 // pred_region
      %30 = dma.done [#allocation3], 2048
    $region21: #{tpu_custom_call.1} parent=1 // pred_fallthru
      _
    %s31 = smul.u32 0, 16
    %v32 = vld [vmem:[#allocation2] sm:$0xff]
    %v33 = vld [vmem:[#allocation2 + $0x8] sm:$0xff]
    %v34 = vld [vmem:[#allocation2 + $0x10] sm:$0xff]
    %v35 = vld [vmem:[#allocation2 + $0x18] sm:$0xff]
    %v36 = vld [vmem:[#allocation2 + $0x20] sm:$0xff]
    %v37 = vld [vmem:[#allocation2 + $0x28] sm:$0xff]
    %v38 = vld [vmem:[#allocation2 + $0x30] sm:$0xff]
    %v39 = vld [vmem:[#allocation2 + $0x38] sm:$0xff]
    %v40 = vld [vmem:[#allocation2 + $0x40] sm:$0xff]
    %v41 = vld [vmem:[#allocation2 + $0x48] sm:$0xff]
    %v42 = vld [vmem:[#allocation2 + $0x50] sm:$0xff]
    %v43 = vld [vmem:[#allocation2 + $0x58] sm:$0xff]
    %v44 = vld [vmem:[#allocation2 + $0x60] sm:$0xff]
    %v45 = vld [vmem:[#allocation2 + $0x68] sm:$0xff]
    %v46 = vld [vmem:[#allocation2 + $0x70] sm:$0xff]
    %v47 = vld [vmem:[#allocation2 + $0x78] sm:$0xff]
    %s48 = scalar_lea.vmem [#allocation2], %s31
    %v49 = vld [vmem:[%s48] sm:$0xff]
    %v50 = vld [vmem:[%s48 + $0x8] sm:$0xff]
    %51 = vmatprep.subr.mxu0 0.0
    %52 = vmatpush1.xpose.msra.mxu0 %v47
    %53 = vmatprep.subr.mxu0 0.0
    %54 = vmatpush1.xpose.msra.mxu0 %v46
    %55 = vmatprep.subr.mxu0 0.0
    %56 = vmatpush1.xpose.msra.mxu0 %v45
    %57 = vmatprep.subr.mxu0 0.0
    %58 = vmatpush1.xpose.msra.mxu0 %v44
    %59 = vmatprep.subr.mxu0 0.0
    %60 = vmatpush1.xpose.msra.mxu0 %v43
    %61 = vmatprep.subr.mxu0 0.0
    %62 = vmatpush1.xpose.msra.mxu0 %v42
    %63 = vmatprep.subr.mxu0 0.0
    %64 = vmatpush1.xpose.msra.mxu0 %v41
    %65 = vmatprep.subr.mxu0 0.0
    %66 = vmatpush1.xpose.msra.mxu0 %v40
    %67 = vmatprep.subr.mxu0 0.0
    %68 = vmatpush1.xpose.msra.mxu0 %v39
    %69 = vmatprep.subr.mxu0 0.0
    %70 = vmatpush1.xpose.msra.mxu0 %v38
    %71 = vmatprep.subr.mxu0 0.0
    %72 = vmatpush1.xpose.msra.mxu0 %v37
    %73 = vmatprep.subr.mxu0 0.0
    %74 = vmatpush1.xpose.msra.mxu0 %v36
    %75 = vmatprep.subr.mxu0 0.0
    %76 = vmatpush1.xpose.msra.mxu0 %v35
    %77 = vmatprep.subr.mxu0 0.0
    %78 = vmatpush1.xpose.msra.mxu0 %v34
    %79 = vmatprep.subr.mxu0 0.0
    %80 = vmatpush1.xpose.msra.mxu0 %v33
    %81 = vmatprep.subr.mxu0 0.0
    %82 = vmatpush1.xpose.msra.mxu0 %v32
    %83 = vmatprep.subr.mxu0 0.0
    %84 = vmatpush2.xpose.msra.mxu0 0.0
    %85 = vmatprep.subr.mxu0 0.0
    %86 = vmatpush2.xpose.msra.mxu0 0.0
    %87 = vmatprep.subr.mxu0 0.0
    %88 = vmatpush2.xpose.msra.mxu0 0.0
    %89 = vmatprep.subr.mxu0 0.0
    %90 = vmatpush2.xpose.msra.mxu0 0.0
    %91 = vmatprep.subr.mxu0 0.0
    %92 = vmatpush2.xpose.msra.mxu0 0.0
    %93 = vmatprep.subr.mxu0 0.0
    %94 = vmatpush2.xpose.msra.mxu0 0.0
    %95 = vmatprep.subr.mxu0 0.0
    %96 = vmatpush2.xpose.msra.mxu0 0.0
    %97 = vmatprep.subr.mxu0 0.0
    %98 = vmatpush2.xpose.msra.mxu0 0.0
    %99 = vmatprep.subr.mxu0 0.0
    %100 = vmatpush2.xpose.msra.mxu0 0.0
    %101 = vmatprep.subr.mxu0 0.0
    %102 = vmatpush2.xpose.msra.mxu0 0.0
    %103 = vmatprep.subr.mxu0 0.0
    %104 = vmatpush2.xpose.msra.mxu0 0.0
    %105 = vmatprep.subr.mxu0 0.0
    %106 = vmatpush2.xpose.msra.mxu0 0.0
    %107 = vmatprep.subr.mxu0 0.0
    %108 = vmatpush2.xpose.msra.mxu0 0.0
    %109 = vmatprep.subr.mxu0 0.0
    %110 = vmatpush2.xpose.msra.mxu0 0.0
    %111 = vmatprep.subr.mxu0 0.0
    %112 = vmatpush2.xpose.msra.mxu0 0.0
    %113 = vmatprep.subr.mxu0 0.0
    %114 = vmatpush2.xpose.msra.mxu0 0.0
    %115 = vmatprep.mubr.f32.mxu0 0.0
    %116 = vmatmul.mubr.f32.gmra.mxu0 %v49
    %v117 = vpop.f32.mrf.mxu0
    %v118 = vadd.f32 0.0, %v117
    %v119 = vpop.f32.mrf.mxu0
    %120 = vmatprep.mubr.f32.mxu0 0.0
    %121 = vmatmul.mubr.f32.gmra.mxu0 %v50
    %v122 = vpop.f32.mrf.mxu0
    %v123 = vadd.f32 0.0, %v122
    %v124 = vpop.f32.mrf.mxu0
    %125 = vdwg.mxu0
    %v126 = vmul.f32 %v118, 14.285714
    %v127 = vmul.f32 %v123, 14.285714
    %v128 = vlaneseq
    %v129 = vshrl.u32 %v128, 7
    %v130 = vadd.s32 %v129, 8
    %v131 = vstv %s31
    %v132 = vadd.s32 %v129, %v131
    %v133 = vadd.s32 %v130, %v131
    %v134 = vlaneseq
    %v135 = vand.u32 %v134, 127
    %vm136 = vcmp.ne.s32.totalorder %v132, %v135
    %vm137 = vcmp.ne.s32.totalorder %v133, %v135
    %vm138 = vcmp.lt.s32.totalorder %v135, 16
    %vm139 = vmand %vm136, %vm138
    %vm140 = vmand %vm137, %vm138
    %v141 = vld [vmem:[%s0] sm:$0xff]
    %v142 = vld [vmem:[%s0 + $0x8] sm:$0xff]
    %v143 = vld [vmem:[%s2] sm:$0x1]
    %144 = vset.pattern.permute.xlu0 0
    %145 = vperm.xlu0 %144, %v141
    %v146 = vpop.permute.xlu0 %145
    %147 = vset.pattern.permute.xlu0 0
    %148 = vperm.xlu0 %147, %v142
    %v149 = vpop.permute.xlu0 %148
    %v150 = vlaneseq
    %v151 = vshrl.u32 %v150, 7
    %v152 = vsub.s32 0, %v151
    %v153 = vrot.slane %v143, %v152
    %vm154 = vcmp.eq.s32.totalorder %v146, %v153
    %vm155 = vcmp.eq.s32.totalorder %v149, %v153
    %vm156 = vmand %vm154, %vm139
    %vm157 = vmand %vm155, %vm140
    %158 = vmax.xlane.f32.xlu0 %v126
    %v159 = vpop.xlane.xlu0 %158
    %160 = vmax.xlane.f32.xlu0 %v127
    %v161 = vpop.xlane.xlu0 %160
    %v162 = vsub.f32 %v126, %v159
    %v163 = vsub.f32 %v127, %v161
    %v164 = vmul.f32 %v162, 1.442695
    %v165 = vpow.pop %v164
    %v166 = vmul.f32 %v163, 1.442695
    %v167 = vpow.pop %v166
    %v168 = vsel %vm139, %v165, 0.0
    %v169 = vsel %vm140, %v167, 0.0
    %170 = vadd.xlane.f32.xlu0 %v168
    %v171 = vpop.xlane.xlu0 %170
    %172 = vadd.xlane.f32.xlu0 %v169
    %v173 = vpop.xlane.xlu0 %172
    %v174 = vsel %vm156, %v162, 0.0
    %v175 = vsel %vm157, %v163, 0.0
    %176 = vadd.xlane.f32.xlu0 %v174
    %v177 = vpop.xlane.xlu0 %176
    %178 = vadd.xlane.f32.xlu0 %v175
    %v179 = vpop.xlane.xlu0 %178
    %v180 = vld [vmem:[%s1] sm:$0xff]
    %v181 = vld [vmem:[%s1 + $0x8] sm:$0xff]
    %v182 = vlog2.pop %v171
    %v183 = vmul.f32 %v182, 0.6931472
    %v184 = vlog2.pop %v173
    %v185 = vmul.f32 %v184, 0.6931472
    %v186 = vmul.f32 %v183, %v180
    %v187 = vmul.f32 %v185, %v181
    %v188 = vsub.f32 %v177, %v186
    %v189 = vsub.f32 %v179, %v187
    %v190 = vrcp.pop %v180
    %v191 = vmul.f32 %v188, %v190
    %v192 = vrcp.pop %v181
    %v193 = vmul.f32 %v189, %v192
    %vm194 = vcmp.lt.s32.totalorder %v132, 16
    %vm195 = vcmp.lt.s32.totalorder %v133, 16
    %v196 = vsel %vm194, %v191, 0.0
    %v197 = vsel %vm195, %v193, 0.0
    %vm198 = vcmask 7168
    %199 = vst.msk [vmem:[%s4] sm:$0xff] %vm198, %v196
    %200 = vst.msk [vmem:[%s4 + $0x8] sm:$0xff] %vm198, %v197
    // Predicated region
    $region22: #{tpu_custom_call.1} parent=1 // pred_check
      _
    $region23: #{tpu_custom_call.1} parent=1 // pred_check_branch
      %202 = sbr.rel (0) target = $region25
    $region24: #{tpu_custom_call.1} parent=1 // pred_region
      _
    $region25: #{tpu_custom_call.1} parent=1 // pred_fallthru
      _
    // Predicated region
    $region26: #{tpu_custom_call.1} parent=1 // pred_check
      _
    $region27: #{tpu_custom_call.1} parent=1 // pred_check_branch
      %204 = sbr.rel (0) target = $region29
    $region28: #{tpu_custom_call.1} parent=1 // pred_region
      _
    $region29: #{tpu_custom_call.1} parent=1 // pred_fallthru
      _
    %205 = vsyncpa [#allocation3], 1

</llo_original>
